<compile_context>
chip_gen: v7x
topology: tpu7x:2x2x1
jax: 0.10.0
libtpu: 0.0.40
codegen_flags: <defaults>
</compile_context>

<pallas_src>
import functools

import jax
import jax.numpy as jnp
from jax.experimental import pallas as pl
from jax.experimental.pallas import tpu as pltpu

INPUT_DIM = 56
HID1 = 64
HID2 = 32
OUT = 4
BN_EPS = 1e-5


# --------------------------------------------------------------------------- kernel
def _esn_kernel(x_ref, wf_ref, bf_ref, w2_ref, b2_ref, w3_ref, b3_ref, o_ref):
    # x tile (blk, 56); bf16 so each matmul is a single-pass bf16 MXU op, f32 accumulate.
    x = x_ref[...].astype(jnp.bfloat16)

    # fused (V-proj @ out_proj @ Linear1): 56 -> 64, ReLU
    h1 = jnp.dot(x, wf_ref[...], preferred_element_type=jnp.float32) + bf_ref[...]
    h1 = jnp.maximum(h1, 0.0).astype(jnp.bfloat16)

    # Linear(64,32) with eval-mode BatchNorm folded into weights/bias, ReLU
    h2 = jnp.dot(h1, w2_ref[...], preferred_element_type=jnp.float32) + b2_ref[...]
    h2 = jnp.maximum(h2, 0.0).astype(jnp.bfloat16)

    # output head (network[-1] or a protocol head, selected in the wrapper)
    out = jnp.dot(h2, w3_ref[...], preferred_element_type=jnp.float32) + b3_ref[...]
    o_ref[...] = out.astype(o_ref.dtype)


# --------------------------------------------------------------------------- params
def init_params(key):
    """Deterministic synthetic parameters (shapes match the PyTorch module).

    NOTE: these use (in, out) layout.  When importing a real PyTorch state_dict, transpose
    the nn.Linear weights ((out, in) storage) and take rows [2E:3E) of
    attention.in_proj_weight / in_proj_bias for the V projection.
    """
    ks = jax.random.split(key, 20)
    u = lambda k, shape, s: jax.random.uniform(k, shape, jnp.float32, -s, s)

    p = {}
    p["w_v"] = u(ks[0], (INPUT_DIM, INPUT_DIM), 0.1)
    p["b_v"] = u(ks[1], (1, INPUT_DIM), 0.1)
    p["w_o"] = u(ks[2], (INPUT_DIM, INPUT_DIM), 0.1)
    p["b_o"] = u(ks[3], (1, INPUT_DIM), 0.1)
    p["w1"] = u(ks[4], (INPUT_DIM, HID1), 0.1)
    p["b1"] = u(ks[5], (1, HID1), 0.1)
    # non-trivial BN stats so the BN fold is actually exercised by the check
    p["bn_gamma"] = 1.0 + u(ks[6], (1, HID1), 0.2)
    p["bn_beta"] = u(ks[7], (1, HID1), 0.1)
    p["bn_mean"] = u(ks[8], (1, HID1), 0.2)
    p["bn_var"] = 1.0 + u(ks[9], (1, HID1), 0.3)
    p["w2"] = u(ks[10], (HID1, HID2), 0.1)
    p["b2"] = u(ks[11], (1, HID2), 0.1)
    p["w3"] = u(ks[12], (HID2, OUT), 0.1)
    p["b3"] = u(ks[13], (1, OUT), 0.1)
    for i, name in enumerate(("uniswap", "sushiswap", "balancer")):
        p[f"head_{name}_w"] = u(ks[14 + 2 * i], (HID2, OUT), 0.1)
        p[f"head_{name}_b"] = u(ks[15 + 2 * i], (1, OUT), 0.1)
    return p


def fold_params(params):
    """One-time offline folding (hoisted out of the hot path, per review).

    Exact: BN (eval affine, located ReLU -> BN -> Linear(64,32) in the module) folds into
    w2/b2; seq-len-1 attention folds into w_fused/b_fused.  Matmul weights are stored bf16,
    biases f32.
    """
    f32 = jnp.float32
    bn_scale = params["bn_gamma"] / jnp.sqrt(params["bn_var"] + BN_EPS)   # (1,64)
    bn_shift = params["bn_beta"] - params["bn_mean"] * bn_scale           # (1,64)

    w_fused = params["w_v"] @ params["w_o"] @ params["w1"]                # (56,64)
    b_fused = (params["b_v"] @ params["w_o"] + params["b_o"]) @ params["w1"] + params["b1"]
    w2 = params["w2"] * bn_scale.T                                        # row-scale (64,32)
    b2 = params["b2"] + bn_shift @ params["w2"]                           # (1,32)

    heads = {None: (params["w3"].astype(jnp.bfloat16), params["b3"].astype(f32))}
    for name in ("uniswap", "sushiswap", "balancer"):
        heads[name] = (params[f"head_{name}_w"].astype(jnp.bfloat16),
                       params[f"head_{name}_b"].astype(f32))
    return {"w_fused": w_fused.astype(jnp.bfloat16), "b_fused": b_fused.astype(f32),
            "w2": w2.astype(jnp.bfloat16), "b2": b2.astype(f32), "heads": heads}


# --------------------------------------------------------------------------- wrapper
def _round_up(x, m):
    return ((x + m - 1) // m) * m


def _vmem_limit(blk, x_itemsize):
    """VMEM budget for one call: lane-padded pipeline buffers + activation temporaries."""
    lane = 128
    x_buf = blk * lane * x_itemsize      # lane-padded x tile
    out_buf = blk * lane * 4             # lane-padded (blk,4) f32 out tile
    act = blk * lane * 4                 # f32 activation slab (h1/h2 temporaries)
    est = 3 * (x_buf + out_buf) + 3 * act + (2 << 20)
    # >= scoped defaults everywhere (v5e 16 MiB), <= v7x physical 64 MiB
    return int(min(max(est, 32 << 20), 64 << 20))


def _call_pallas(x, weights, *, n_rows, blk):
    """One pallas_call over the first n_rows rows of x (n_rows % blk == 0)."""
    d = x.shape[-1]
    grid = n_rows // blk
    xb = jnp.dtype(x.dtype).itemsize

    x_kwargs = {}
    if blk <= 1024 and grid >= 3:
        # many small streamed tiles: a 3rd buffer hides more exposed DMA (review item)
        x_kwargs["pipeline_mode"] = pl.Buffered(3)
    full = lambda shape: pl.BlockSpec(shape, lambda i: (0, 0))
    in_specs = [
        pl.BlockSpec((blk, d), lambda i: (i, 0), **x_kwargs),   # x, tiled over batch
        full((INPUT_DIM, HID1)), full((1, HID1)),                # w_fused, b_fused
        full((HID1, HID2)), full((1, HID2)),                     # w2', b2'
        full((HID2, OUT)), full((1, OUT)),                       # w_out, b_out
    ]

    flops = 2 * n_rows * (INPUT_DIM * HID1 + HID1 * HID2 + HID2 * OUT)
    bytes_accessed = (n_rows * (INPUT_DIM * xb + OUT * 4)
                      + 2 * (INPUT_DIM * HID1 + HID1 * HID2 + HID2 * OUT)
                      + 4 * (HID1 + HID2 + OUT))

    return pl.pallas_call(
        _esn_kernel,
        out_shape=jax.ShapeDtypeStruct((n_rows, OUT), jnp.float32),
        grid_spec=pltpu.PrefetchScalarGridSpec(
            num_scalar_prefetch=0,
            grid=(grid,),
            in_specs=in_specs,
            out_specs=pl.BlockSpec((blk, OUT), lambda i: (i, 0)),
        ),
        compiler_params=pltpu.CompilerParams(
            dimension_semantics=("parallel",),               # batch axis -> v7x's 2 TCs
            vmem_limit_bytes=_vmem_limit(blk, xb)),
        cost_estimate=pl.CostEstimate(
            flops=flops, transcendentals=0, bytes_accessed=bytes_accessed),
    )(x, *weights)


@functools.partial(jax.jit, static_argnames=("block_b",))
def _forward_impl(x, w_fused, b_fused, w2, b2, w_out, b_out, *, block_b=4096):
    n, d = x.shape
    assert d == INPUT_DIM
    weights = (w_fused, b_fused, w2, b2, w_out, b_out)

    # Tile choice: big tiles (amortize ~0.35us/step), multiple of 16 (bf16 sublane packing),
    # capped at ~ceil(n/2) so grid >= 2 whenever there is enough work (megacore on v7x).
    blk = _round_up(min(block_b, max((n + 1) // 2, 1)), 16)
    n_main = (n // blk) * blk
    rem = n - n_main

    parts = []
    if n_main:
        # Full x buffer passed as-is: no padded copy, no slice copy; the grid simply only
        # visits the first n_main rows.
        parts.append(_call_pallas(x, weights, n_rows=n_main, blk=blk))
    if rem:
        # Ragged tail: pad only the last <blk rows (tiny copy) and run one small extra call.
        blk_t = _round_up(rem, 16)
        x_tail = jnp.pad(x[n_main:], ((0, blk_t - rem), (0, 0)))
        parts.append(_call_pallas(x_tail, weights, n_rows=blk_t, blk=blk_t)[:rem])
    return parts[0] if len(parts) == 1 else jnp.concatenate(parts, axis=0)


def execution_strategy_forward(x, folded, protocol=None, block_b=4096):
    """x: (N, 56) float32 or bfloat16 -> (N, 4) float32.

    Supplying x in bfloat16 halves the dominant HBM stream (the kernel consumes bf16 either
    way); f32 inputs are accepted and cast in-kernel, NOT in the wrapper, to avoid an extra
    HBM pass over x.
    """
    w_out, b_out = folded["heads"].get(protocol, folded["heads"][None])
    return _forward_impl(x, folded["w_fused"], folded["b_fused"], folded["w2"],
                         folded["b2"], w_out, b_out, block_b=block_b)


# --------------------------------------------------------------------------- reference
def _reference_forward(x, params, protocol=None):
    """Pure-JAX f32 reference (unfused, eval-mode semantics of the PyTorch module)."""
    x = x.astype(jnp.float32)
    v = x @ params["w_v"] + params["b_v"]
    attn = v @ params["w_o"] + params["b_o"]           # softmax over length-1 key axis == 1
    h1 = jnp.maximum(attn @ params["w1"] + params["b1"], 0.0)
    h1 = (h1 - params["bn_mean"]) / jnp.sqrt(params["bn_var"] + BN_EPS) \
         * params["bn_gamma"] + params["bn_beta"]
    h2 = jnp.maximum(h1 @ params["w2"] + params["b2"], 0.0)
    if protocol is not None and f"head_{protocol}_w" in params:
        return h2 @ params[f"head_{protocol}_w"] + params[f"head_{protocol}_b"]
    return h2 @ params["w3"] + params["b3"]


# --------------------------------------------------------------------------- demo
if __name__ == "__main__":
    key = jax.random.PRNGKey(0)
    k_p, k1, k2, k3, k4 = jax.random.split(key, 5)
    params = init_params(k_p)
    folded = fold_params(params)          # once, outside the hot path (review item)
    tol = dict(atol=2e-2, rtol=2e-2)      # bf16 weight/activation stream vs f32 reference

    # 1) tiny f32 batch -> tail-only path (n_main == 0), default head
    x1 = jax.random.normal(k1, (8, INPUT_DIM), jnp.float32)
    o1 = execution_strategy_forward(x1, folded)
    jax.block_until_ready(o1)
    assert o1.shape == (8, OUT) and o1.dtype == jnp.float32
    assert jnp.allclose(o1, _reference_forward(x1, params), **tol)

    # 2) bf16 stream, protocol head, ragged batch -> main call (grid=1) + small tail call
    x2 = jax.random.normal(k2, (300, INPUT_DIM), jnp.float32).astype(jnp.bfloat16)
    o2 = execution_strategy_forward(x2, folded, protocol="uniswap")
    jax.block_until_ready(o2)
    assert o2.shape == (300, OUT)
    assert jnp.allclose(o2, _reference_forward(x2, params, "uniswap"), **tol)

    # 3) bf16 stream, grid=2 (batch axis can shard across v7x's two TensorCores), no tail
    x3 = jax.random.normal(k3, (1024, INPUT_DIM), jnp.float32).astype(jnp.bfloat16)
    o3 = execution_strategy_forward(x3, folded, protocol="balancer")
    jax.block_until_ready(o3)
    assert jnp.allclose(o3, _reference_forward(x3, params, "balancer"), **tol)

    # 4) many small streamed tiles -> exercises the pl.Buffered(3) pipeline path
    x4 = jax.random.normal(k4, (512, INPUT_DIM), jnp.float32).astype(jnp.bfloat16)
    o4 = execution_strategy_forward(x4, folded, protocol="sushiswap", block_b=64)
    jax.block_until_ready(o4)
    assert jnp.allclose(o4, _reference_forward(x4, params, "sushiswap"), **tol)

    print("KERNEL_OK")
</pallas_src>

<mosaic_0001>
module attributes {stable_mosaic.version = 11 : i64} {
  func.func @_esn_kernel(%arg0: i32, %arg1: memref<16x56xf32, #tpu.memory_space<vmem>>, %arg2: memref<56x64xbf16, #tpu.memory_space<vmem>>, %arg3: memref<1x64xf32, #tpu.memory_space<vmem>>, %arg4: memref<64x32xbf16, #tpu.memory_space<vmem>>, %arg5: memref<1x32xf32, #tpu.memory_space<vmem>>, %arg6: memref<32x4xbf16, #tpu.memory_space<vmem>>, %arg7: memref<1x4xf32, #tpu.memory_space<vmem>>, %arg8: memref<16x4xf32, #tpu.memory_space<vmem>>) attributes {dimension_semantics = [#tpu.dimension_semantics<parallel>], iteration_bounds = array<i64: 1>, scalar_prefetch = 0 : i64, scratch_operands = 0 : i64, tpu.core_type = #tpu.core_type<tc>, window_params = [{transform_indices = @transform_0, window_bounds = array<i64: 16, 56>}, {pipeline_mode = #tpu.pipeline_mode<synchronous>, transform_indices = @transform_1, window_bounds = array<i64: 56, 64>}, {pipeline_mode = #tpu.pipeline_mode<synchronous>, transform_indices = @transform_2, window_bounds = array<i64: 1, 64>}, {pipeline_mode = #tpu.pipeline_mode<synchronous>, transform_indices = @transform_3, window_bounds = array<i64: 64, 32>}, {pipeline_mode = #tpu.pipeline_mode<synchronous>, transform_indices = @transform_4, window_bounds = array<i64: 1, 32>}, {pipeline_mode = #tpu.pipeline_mode<synchronous>, transform_indices = @transform_5, window_bounds = array<i64: 32, 4>}, {pipeline_mode = #tpu.pipeline_mode<synchronous>, transform_indices = @transform_6, window_bounds = array<i64: 1, 4>}, {transform_indices = @transform_7, window_bounds = array<i64: 16, 4>}]} {
    %c0 = arith.constant 0 : index
    %c0_0 = arith.constant 0 : index
    %0 = vector.load %arg1[%c0, %c0_0] : memref<16x56xf32, #tpu.memory_space<vmem>>, vector<16x56xf32>
    %1 = arith.truncf %0 : vector<16x56xf32> to vector<16x56xbf16>
    %c0_1 = arith.constant 0 : index
    %c0_2 = arith.constant 0 : index
    %2 = vector.load %arg2[%c0_1, %c0_2] : memref<56x64xbf16, #tpu.memory_space<vmem>>, vector<56x64xbf16>
    %cst = arith.constant dense<0.000000e+00> : vector<16x64xf32>
    %3 = tpu.matmul %1, %2, %cst {dimension_numbers = #tpu.dot_dimension_numbers<[1], [0], [0], [1], [0, 0, 1, 1], [], []>} : vector<16x56xbf16>, vector<56x64xbf16>, vector<16x64xf32> -> vector<16x64xf32>
    %c0_3 = arith.constant 0 : index
    %c0_4 = arith.constant 0 : index
    %4 = vector.load %arg3[%c0_3, %c0_4] : memref<1x64xf32, #tpu.memory_space<vmem>>, vector<1x64xf32>
    %5 = vector.broadcast %4 : vector<1x64xf32> to vector<16x64xf32>
    %6 = arith.addf %3, %5 : vector<16x64xf32>
    %cst_5 = arith.constant 0.000000e+00 : f32
    %7 = vector.broadcast %cst_5 : f32 to vector<16x64xf32>
    %8 = arith.maximumf %6, %7 : vector<16x64xf32>
    %9 = arith.truncf %8 : vector<16x64xf32> to vector<16x64xbf16>
    %c0_6 = arith.constant 0 : index
    %c0_7 = arith.constant 0 : index
    %10 = vector.load %arg4[%c0_6, %c0_7] : memref<64x32xbf16, #tpu.memory_space<vmem>>, vector<64x32xbf16>
    %cst_8 = arith.constant dense<0.000000e+00> : vector<16x32xf32>
    %11 = tpu.matmul %9, %10, %cst_8 {dimension_numbers = #tpu.dot_dimension_numbers<[1], [0], [0], [1], [0, 0, 1, 1], [], []>} : vector<16x64xbf16>, vector<64x32xbf16>, vector<16x32xf32> -> vector<16x32xf32>
    %c0_9 = arith.constant 0 : index
    %c0_10 = arith.constant 0 : index
    %12 = vector.load %arg5[%c0_9, %c0_10] : memref<1x32xf32, #tpu.memory_space<vmem>>, vector<1x32xf32>
    %13 = vector.broadcast %12 : vector<1x32xf32> to vector<16x32xf32>
    %14 = arith.addf %11, %13 : vector<16x32xf32>
    %cst_11 = arith.constant 0.000000e+00 : f32
    %15 = vector.broadcast %cst_11 : f32 to vector<16x32xf32>
    %16 = arith.maximumf %14, %15 : vector<16x32xf32>
    %17 = arith.truncf %16 : vector<16x32xf32> to vector<16x32xbf16>
    %c0_12 = arith.constant 0 : index
    %c0_13 = arith.constant 0 : index
    %18 = vector.load %arg6[%c0_12, %c0_13] : memref<32x4xbf16, #tpu.memory_space<vmem>>, vector<32x4xbf16>
    %cst_14 = arith.constant dense<0.000000e+00> : vector<16x4xf32>
    %19 = tpu.matmul %17, %18, %cst_14 {dimension_numbers = #tpu.dot_dimension_numbers<[1], [0], [0], [1], [0, 0, 1, 1], [], []>} : vector<16x32xbf16>, vector<32x4xbf16>, vector<16x4xf32> -> vector<16x4xf32>
    %c0_15 = arith.constant 0 : index
    %c0_16 = arith.constant 0 : index
    %20 = vector.load %arg7[%c0_15, %c0_16] : memref<1x4xf32, #tpu.memory_space<vmem>>, vector<1x4xf32>
    %21 = vector.broadcast %20 : vector<1x4xf32> to vector<16x4xf32>
    %22 = arith.addf %19, %21 : vector<16x4xf32>
    %c0_17 = arith.constant 0 : index
    %c0_18 = arith.constant 0 : index
    %23 = vector.load %arg8[%c0_17, %c0_18] : memref<16x4xf32, #tpu.memory_space<vmem>>, vector<16x4xf32>
    tpu.vector_store %arg8[%c0_17, %c0_18], %22 {strides = array<i32>} : memref<16x4xf32, #tpu.memory_space<vmem>>, vector<16x4xf32>,
    return
  }
  func.func @transform_0(%arg0: i32) -> (i32, i32) {
    %c0_i32 = arith.constant 0 : i32
    %c0_i32_0 = arith.constant 0 : i32
    return %arg0, %c0_i32 : i32, i32
  }
  func.func @transform_1(%arg0: i32) -> (i32, i32) {
    %c0_i32 = arith.constant 0 : i32
    %c0_i32_0 = arith.constant 0 : i32
    %c0_i32_1 = arith.constant 0 : i32
    return %c0_i32, %c0_i32_0 : i32, i32
  }
  func.func @transform_2(%arg0: i32) -> (i32, i32) {
    %c0_i32 = arith.constant 0 : i32
    %c0_i32_0 = arith.constant 0 : i32
    %c0_i32_1 = arith.constant 0 : i32
    return %c0_i32, %c0_i32_0 : i32, i32
  }
  func.func @transform_3(%arg0: i32) -> (i32, i32) {
    %c0_i32 = arith.constant 0 : i32
    %c0_i32_0 = arith.constant 0 : i32
    %c0_i32_1 = arith.constant 0 : i32
    return %c0_i32, %c0_i32_0 : i32, i32
  }
  func.func @transform_4(%arg0: i32) -> (i32, i32) {
    %c0_i32 = arith.constant 0 : i32
    %c0_i32_0 = arith.constant 0 : i32
    %c0_i32_1 = arith.constant 0 : i32
    return %c0_i32, %c0_i32_0 : i32, i32
  }
  func.func @transform_5(%arg0: i32) -> (i32, i32) {
    %c0_i32 = arith.constant 0 : i32
    %c0_i32_0 = arith.constant 0 : i32
    %c0_i32_1 = arith.constant 0 : i32
    return %c0_i32, %c0_i32_0 : i32, i32
  }
  func.func @transform_6(%arg0: i32) -> (i32, i32) {
    %c0_i32 = arith.constant 0 : i32
    %c0_i32_0 = arith.constant 0 : i32
    %c0_i32_1 = arith.constant 0 : i32
    return %c0_i32, %c0_i32_0 : i32, i32
  }
  func.func @transform_7(%arg0: i32) -> (i32, i32) {
    %c0_i32 = arith.constant 0 : i32
    %c0_i32_0 = arith.constant 0 : i32
    return %arg0, %c0_i32 : i32, i32
  }
}

</mosaic_0001>

<llo_original>
// kernel: _forward_impl.1
$region0: #{_forward_impl.1}
  #allocation0 [shape = 'u32[]', space=smem, size = 0x4, offset = 0x4, fixed_abs, tag = 'smem constant byte address 0x4 - core index']
  #allocation1 [shape = 'u32[144,128]{1,0:T(1,128)}', space=vmem, size = 0x12000, scoped, tag = 'internal scratch']
  %s0 = inlined_call_operand.vmem [shape: f32[16,56], index: 0, kind: input, shape index: {}]
  %s1 = inlined_call_operand.vmem [shape: bf16[56,64], index: 1, kind: input, shape index: {}]
  %s2 = inlined_call_operand.vmem [shape: f32[1,64], index: 2, kind: input, shape index: {}]
  %s3 = inlined_call_operand.vmem [shape: bf16[64,32], index: 3, kind: input, shape index: {}]
  %s4 = inlined_call_operand.vmem [shape: f32[1,32], index: 4, kind: input, shape index: {}]
  %s5 = inlined_call_operand.vmem [shape: bf16[32,4], index: 5, kind: input, shape index: {}]
  %s6 = inlined_call_operand.vmem [shape: f32[1,4], index: 6, kind: input, shape index: {}]
  %s7 = inlined_call_operand.vmem [shape: f32[16,4], index: 7, kind: output, shape index: {}]
  %s8 = sld [smem:[#allocation0]]
  $region38: #{_forward_impl.1} parent=0
    _
  %s10 = ssub.s32 1, %s8
  %s11 = scalar_select 0, %s10, %s8
  // Predicated region
  $region2: #{_forward_impl.1} parent=0 // pred_check
    _
  $region3: #{_forward_impl.1} parent=0 // pred_check_branch
    %13 = sbr.rel (0) target = $region5
  $region4: #{_forward_impl.1} parent=0 // pred_region
    _
  $region5: #{_forward_impl.1} parent=0 // pred_fallthru
    _
  // Predicated region
  $region6: #{_forward_impl.1} parent=0 // pred_check
    _
  $region7: #{_forward_impl.1} parent=0 // pred_check_branch
    %15 = sbr.rel (0) target = $region9
  $region8: #{_forward_impl.1} parent=0 // pred_region
    _
  $region9: #{_forward_impl.1} parent=0 // pred_fallthru
    _
  // Predicated region
  $region10: #{_forward_impl.1} parent=0 // pred_check
    _
  $region11: #{_forward_impl.1} parent=0 // pred_check_branch
    %17 = sbr.rel (0) target = $region13
  $region12: #{_forward_impl.1} parent=0 // pred_region
    _
  $region13: #{_forward_impl.1} parent=0 // pred_fallthru
    _
  // Predicated region
  $region14: #{_forward_impl.1} parent=0 // pred_check
    _
  $region15: #{_forward_impl.1} parent=0 // pred_check_branch
    %19 = sbr.rel (0) target = $region17
  $region16: #{_forward_impl.1} parent=0 // pred_region
    _
  $region17: #{_forward_impl.1} parent=0 // pred_fallthru
    _
  // Predicated region
  $region18: #{_forward_impl.1} parent=0 // pred_check
    _
  $region19: #{_forward_impl.1} parent=0 // pred_check_branch
    %21 = sbr.rel (0) target = $region21
  $region20: #{_forward_impl.1} parent=0 // pred_region
    _
  $region21: #{_forward_impl.1} parent=0 // pred_fallthru
    _
  // Predicated region
  $region22: #{_forward_impl.1} parent=0 // pred_check
    _
  $region23: #{_forward_impl.1} parent=0 // pred_check_branch
    %23 = sbr.rel (0) target = $region25
  $region24: #{_forward_impl.1} parent=0 // pred_region
    _
  $region25: #{_forward_impl.1} parent=0 // pred_fallthru
    _
  // Predicated region
  $region26: #{_forward_impl.1} parent=0 // pred_check
    _
  $region27: #{_forward_impl.1} parent=0 // pred_check_branch
    %25 = sbr.rel (0) target = $region29
  $region28: #{_forward_impl.1} parent=0 // pred_region
    _
  $region29: #{_forward_impl.1} parent=0 // pred_fallthru
    _
  %v27 = vld [vmem:[%s0] sm:$0xff]
  %v28 = vld [vmem:[%s0 + $0x8] sm:$0xff]
  %v29 = vpack.c.bf16 %v28, %v27
  %v30 = vld [vmem:[%s1] sm:$0xf]
  %v31 = vld [vmem:[%s1 + $0x4] sm:$0xf]
  %v32 = vld [vmem:[%s1 + $0x8] sm:$0xf]
  %v33 = vld [vmem:[%s1 + $0xc] sm:$0xf]
  %v34 = vld [vmem:[%s1 + $0x10] sm:$0xf]
  %v35 = vld [vmem:[%s1 + $0x14] sm:$0xf]
  %v36 = vld [vmem:[%s1 + $0x18] sm:$0xf]
  %v37 = vld [vmem:[%s2] sm:$0x1]
  %v39 = vlaneseq
  %v40 = vshrl.u32 %v39, 7
  %v41 = vsub.s32 0, %v40
  %v42 = vrot.slane %v37, %v41
  %v51 = vunpack.c.l.b16 %v30
  %v52 = vunpack.c.l.b16 %v31
  %v53 = vunpack.c.l.b16 %v32
  %v54 = vunpack.c.l.b16 %v33
  %v55 = vunpack.c.l.b16 %v34
  %v56 = vunpack.c.l.b16 %v35
  %v57 = vunpack.c.l.b16 %v36
  %v58 = vpack.c.b16 %v52, %v51
  %v59 = vpack.c.b16 %v54, %v53
  %v60 = vpack.c.b16 %v56, %v55
  %v61 = vpack.c.b16 %v57, %v57
  %vm65 = vcmask 457728
  %v67 = vsel %vm65, %v29, 0
  %vm69 = vcmask 1043456
  %v71 = vsel %vm69, %v61, 0
  %73 = vmatprep.subr.bf16.mxu0 0
  %74 = vmatpush1.bf16.msra.mxu0 %v58
  %75 = vmatprep.subr.bf16.mxu0 0
  %76 = vmatpush1.bf16.msra.mxu0 %v59
  %77 = vmatprep.subr.bf16.mxu0 0
  %78 = vmatpush1.bf16.msra.mxu0 %v60
  %79 = vmatprep.subr.bf16.mxu0 0
  %80 = vmatpush1.bf16.msra.mxu0 %v71
  %81 = vmatprep.subr.bf16.mxu0 0
  %82 = vmatpush1.bf16.msra.mxu0 0
  %83 = vmatprep.subr.bf16.mxu0 0
  %84 = vmatpush1.bf16.msra.mxu0 0
  %85 = vmatprep.subr.bf16.mxu0 0
  %86 = vmatpush1.bf16.msra.mxu0 0
  %87 = vmatprep.subr.bf16.mxu0 0
  %88 = vmatpush1.bf16.msra.mxu0 0
  %89 = vmatprep.subr.bf16.mxu0 0
  %90 = vmatpush1.bf16.msra.mxu0 0
  %91 = vmatprep.subr.bf16.mxu0 0
  %92 = vmatpush1.bf16.msra.mxu0 0
  %93 = vmatprep.subr.bf16.mxu0 0
  %94 = vmatpush1.bf16.msra.mxu0 0
  %95 = vmatprep.subr.bf16.mxu0 0
  %96 = vmatpush1.bf16.msra.mxu0 0
  %97 = vmatprep.subr.bf16.mxu0 0
  %98 = vmatpush1.bf16.msra.mxu0 0
  %99 = vmatprep.subr.bf16.mxu0 0
  %100 = vmatpush1.bf16.msra.mxu0 0
  %101 = vmatprep.subr.bf16.mxu0 0
  %102 = vmatpush1.bf16.msra.mxu0 0
  %103 = vmatprep.subr.bf16.mxu0 0
  %104 = vmatpush1.bf16.msra.mxu0 0
  %105 = vmatprep.mubr.bf16.mxu0 0
  %106 = vmatmul.mubr.bf16.gmra.mrb[0].mxu0 %v67
  %v107 = vpop.f32.mrb[0].mxu0
  %v108 = vadd.f32 %v42, %v107
  %v109 = vpop.f32.mrb[0].mxu0
  %v110 = vpop.f32.mrb[0].mxu0
  %v111 = vadd.f32 %v42, %v110
  %v112 = vpop.f32.mrb[0].mxu0
  %113 = vdwg.mxu0
  %v114 = vmax.f32 %v108, 0.0
  %v115 = vmax.f32 %v111, 0.0
  %v116 = vpack.c.bf16 %v115, %v114
  %v117 = vld [vmem:[%s3] sm:$0xf]
  %v118 = vld [vmem:[%s3 + $0x4] sm:$0xf]
  %v119 = vld [vmem:[%s3 + $0x8] sm:$0xf]
  %v120 = vld [vmem:[%s3 + $0xc] sm:$0xf]
  %v121 = vld [vmem:[%s3 + $0x10] sm:$0xf]
  %v122 = vld [vmem:[%s3 + $0x14] sm:$0xf]
  %v123 = vld [vmem:[%s3 + $0x18] sm:$0xf]
  %v124 = vld [vmem:[%s3 + $0x1c] sm:$0xf]
  %v125 = vld [vmem:[%s4] sm:$0x1]
  %v127 = vlaneseq
  %v128 = vshrl.u32 %v127, 7
  %v129 = vsub.s32 0, %v128
  %v130 = vrot.slane %v125, %v129
  %v140 = vunpack.c.l.b16 %v117
  %v141 = vunpack.c.l.b16 %v118
  %v142 = vunpack.c.l.b16 %v119
  %v143 = vunpack.c.l.b16 %v120
  %v144 = vunpack.c.l.b16 %v121
  %v145 = vunpack.c.l.b16 %v122
  %v146 = vunpack.c.l.b16 %v123
  %v147 = vunpack.c.l.b16 %v124
  %v148 = vpack.c.b16 %v141, %v140
  %v149 = vpack.c.b16 %v143, %v142
  %v150 = vpack.c.b16 %v145, %v144
  %v151 = vpack.c.b16 %v147, %v146
  %vm156 = vcmask 523264
  %v158 = vsel %vm156, %v116, 0
  %160 = vmatprep.subr.bf16.mxu0 0
  %161 = vmatpush1.bf16.msra.mxu0 %v148
  %162 = vmatprep.subr.bf16.mxu0 0
  %163 = vmatpush1.bf16.msra.mxu0 %v149
  %164 = vmatprep.subr.bf16.mxu0 0
  %165 = vmatpush1.bf16.msra.mxu0 %v150
  %166 = vmatprep.subr.bf16.mxu0 0
  %167 = vmatpush1.bf16.msra.mxu0 %v151
  %168 = vmatprep.subr.bf16.mxu0 0
  %169 = vmatpush1.bf16.msra.mxu0 0
  %170 = vmatprep.subr.bf16.mxu0 0
  %171 = vmatpush1.bf16.msra.mxu0 0
  %172 = vmatprep.subr.bf16.mxu0 0
  %173 = vmatpush1.bf16.msra.mxu0 0
  %174 = vmatprep.subr.bf16.mxu0 0
  %175 = vmatpush1.bf16.msra.mxu0 0
  %176 = vmatprep.subr.bf16.mxu0 0
  %177 = vmatpush1.bf16.msra.mxu0 0
  %178 = vmatprep.subr.bf16.mxu0 0
  %179 = vmatpush1.bf16.msra.mxu0 0
  %180 = vmatprep.subr.bf16.mxu0 0
  %181 = vmatpush1.bf16.msra.mxu0 0
  %182 = vmatprep.subr.bf16.mxu0 0
  %183 = vmatpush1.bf16.msra.mxu0 0
  %184 = vmatprep.subr.bf16.mxu0 0
  %185 = vmatpush1.bf16.msra.mxu0 0
  %186 = vmatprep.subr.bf16.mxu0 0
  %187 = vmatpush1.bf16.msra.mxu0 0
  %188 = vmatprep.subr.bf16.mxu0 0
  %189 = vmatpush1.bf16.msra.mxu0 0
  %190 = vmatprep.subr.bf16.mxu0 0
  %191 = vmatpush1.bf16.msra.mxu0 0
  %192 = vmatprep.mubr.bf16.mxu0 0
  %193 = vmatmul.mubr.bf16.gmra.mrb[0].mxu0 %v158
  %v194 = vpop.f32.mrb[0].mxu0
  %v195 = vadd.f32 %v130, %v194
  %v196 = vpop.f32.mrb[0].mxu0
  %v197 = vpop.f32.mrb[0].mxu0
  %v198 = vadd.f32 %v130, %v197
  %v199 = vpop.f32.mrb[0].mxu0
  %200 = vdwg.mxu0
  %v201 = vmax.f32 %v195, 0.0
  %v202 = vmax.f32 %v198, 0.0
  %v203 = vpack.c.bf16 %v202, %v201
  %v204 = vld [vmem:[%s5] sm:$0xf]
  %v205 = vld [vmem:[%s5 + $0x4] sm:$0xf]
  %v206 = vld [vmem:[%s5 + $0x8] sm:$0xf]
  %v207 = vld [vmem:[%s5 + $0xc] sm:$0xf]
  %v208 = vld [vmem:[%s6] sm:$0x1]
  %v210 = vlaneseq
  %v211 = vshrl.u32 %v210, 7
  %v212 = vsub.s32 0, %v211
  %v213 = vrot.slane %v208, %v212
  %v219 = vunpack.c.l.b16 %v204
  %v220 = vunpack.c.l.b16 %v205
  %v221 = vunpack.c.l.b16 %v206
  %v222 = vunpack.c.l.b16 %v207
  %v223 = vpack.c.b16 %v220, %v219
  %v224 = vpack.c.b16 %v222, %v221
  %vm227 = vcmask 261120
  %v229 = vsel %vm227, %v203, 0
  %231 = vmatprep.subr.bf16.mxu0 0
  %232 = vmatpush1.bf16.msra.mxu0 %v223
  %233 = vmatprep.subr.bf16.mxu0 0
  %234 = vmatpush1.bf16.msra.mxu0 %v224
  %235 = vmatprep.subr.bf16.mxu0 0
  %236 = vmatpush1.bf16.msra.mxu0 0
  %237 = vmatprep.subr.bf16.mxu0 0
  %238 = vmatpush1.bf16.msra.mxu0 0
  %239 = vmatprep.subr.bf16.mxu0 0
  %240 = vmatpush1.bf16.msra.mxu0 0
  %241 = vmatprep.subr.bf16.mxu0 0
  %242 = vmatpush1.bf16.msra.mxu0 0
  %243 = vmatprep.subr.bf16.mxu0 0
  %244 = vmatpush1.bf16.msra.mxu0 0
  %245 = vmatprep.subr.bf16.mxu0 0
  %246 = vmatpush1.bf16.msra.mxu0 0
  %247 = vmatprep.subr.bf16.mxu0 0
  %248 = vmatpush1.bf16.msra.mxu0 0
  %249 = vmatprep.subr.bf16.mxu0 0
  %250 = vmatpush1.bf16.msra.mxu0 0
  %251 = vmatprep.subr.bf16.mxu0 0
  %252 = vmatpush1.bf16.msra.mxu0 0
  %253 = vmatprep.subr.bf16.mxu0 0
  %254 = vmatpush1.bf16.msra.mxu0 0
  %255 = vmatprep.subr.bf16.mxu0 0
  %256 = vmatpush1.bf16.msra.mxu0 0
  %257 = vmatprep.subr.bf16.mxu0 0
  %258 = vmatpush1.bf16.msra.mxu0 0
  %259 = vmatprep.subr.bf16.mxu0 0
  %260 = vmatpush1.bf16.msra.mxu0 0
  %261 = vmatprep.subr.bf16.mxu0 0
  %262 = vmatpush1.bf16.msra.mxu0 0
  %263 = vmatprep.mubr.bf16.mxu0 0
  %264 = vmatmul.mubr.bf16.gmra.mrb[0].mxu0 %v229
  %v265 = vpop.f32.mrb[0].mxu0
  %v266 = vadd.f32 %v213, %v265
  %v267 = vpop.f32.mrb[0].mxu0
  %v268 = vpop.f32.mrb[0].mxu0
  %v269 = vadd.f32 %v213, %v268
  %v270 = vpop.f32.mrb[0].mxu0
  %271 = vdwg.mxu0
  %vm272 = vcmask 31744
  %273 = vst.msk [vmem:[%s7] sm:$0xff] %vm272, %v266
  %274 = vst.msk [vmem:[%s7 + $0x8] sm:$0xff] %vm272, %v269
  // Predicated region
  $region30: #{_forward_impl.1} parent=0 // pred_check
    _
  $region31: #{_forward_impl.1} parent=0 // pred_check_branch
    %276 = sbr.rel (0) target = $region33
  $region32: #{_forward_impl.1} parent=0 // pred_region
    _
  $region33: #{_forward_impl.1} parent=0 // pred_fallthru
    _
  // Predicated region
  $region34: #{_forward_impl.1} parent=0 // pred_check
    _
  $region35: #{_forward_impl.1} parent=0 // pred_check_branch
    %278 = sbr.rel (0) target = $region37
  $region36: #{_forward_impl.1} parent=0 // pred_region
    _
  $region37: #{_forward_impl.1} parent=0 // pred_fallthru
    _

</llo_original>
